<compile_context>
chip_gen: v7x
topology: tpu7x:2x2x1
jax: 0.10.0
libtpu: 0.0.40
codegen_flags: <defaults>
</compile_context>

<pallas_src>
import jax
import jax.numpy as jnp
from jax.experimental import pallas as pl
from jax.experimental.pallas import tpu as pltpu


def _round_up(v, m):
    return ((v + m - 1) // m) * m


def _cnn_maxpool_kernel(x_ref, w_ref, b_ref, o_ref, xcol_ref):
    # x_ref   : (TB, S, D)        compute dtype
    # w_ref   : (W*D, C_pad)      compute dtype, im2col weight matrix
    # b_ref   : (1, 1, C_pad)     f32 bias
    # o_ref   : (TB, 1, C_pad)    f32 max-pooled output block
    # xcol_ref: (TB, L_pad, W*D)  VMEM im2col scratch, L_pad % 8 == 0
    tb, s, d = x_ref.shape
    kd, cp = w_ref.shape
    win = kd // d
    l_out = s - win + 1
    l_pad = xcol_ref.shape[1]

    # ---- in-kernel im2col: `win` (3-5) small shifted copies ----
    for w in range(win):  # static unroll
        xcol_ref[:, 0:l_out, w * d:(w + 1) * d] = x_ref[:, w:w + l_out, :]
    if l_pad > l_out:  # keep uninitialized scratch (possible NaNs) out of the MXU
        xcol_ref[:, l_out:l_pad, :] = jnp.zeros(
            (tb, l_pad - l_out, kd), xcol_ref.dtype)

    # ---- ONE matmul per grid step, K = window*D (reshapes are layout-free) ----
    xc = xcol_ref[...].reshape(tb * l_pad, kd)
    y = jnp.dot(xc, w_ref[...], preferred_element_type=jnp.float32)
    y3 = y.reshape(tb, l_pad, cp)

    # Padded time rows must not win the max.
    if l_pad > l_out:
        t_idx = jax.lax.broadcasted_iota(jnp.int32, (tb, l_pad, cp), 1)
        y3 = jnp.where(t_idx < l_out, y3, -jnp.inf)

    # Bias is time-invariant: add once after the max (== max(scores + b)).
    o_ref[...] = jnp.max(y3, axis=1, keepdims=True) + b_ref[...]


def _vmem_limit_bytes():
    # Generation-aware budget: ~70% of physical VMEM (v5e/v6e: 128 MiB,
    # v7x: 64 MiB), with a safe fallback if the query is unavailable.
    try:
        cap = pltpu.get_tpu_info().vmem_capacity_bytes
    except Exception:
        cap = 64 * 1024 * 1024
    return min(max(int(cap * 0.7), 32 * 1024 * 1024), 100 * 1024 * 1024)


def cnn_maxpool(x, weight, bias, window_size, *, batch_tile=8, lane_pad=128,
                compute_dtype=jnp.bfloat16):
    """x: (B, S, D). weight: (C, 1, window, D) (PyTorch Conv2d layout). bias: (C,)."""
    B, S, D = x.shape
    C = weight.shape[0]
    W = window_size
    L_out = S - W + 1
    assert L_out >= 1, "sequence shorter than conv window"

    # Batch tile: keep >= 2 grid steps when B >= 2 (both v7x TensorCores busy)
    # and never pad a tiny batch up to a large tile.
    tb = min(batch_tile, max(1, -(-B // 2)))
    B_pad = _round_up(B, tb)
    C_pad = _round_up(C, lane_pad)
    L_pad = _round_up(L_out, 8)      # sublane-aligned im2col rows -> free reshapes

    x_p = x.astype(compute_dtype)
    if B_pad != B:
        x_p = jnp.pad(x_p, ((0, B_pad - B), (0, 0), (0, 0)))

    # im2col weight matrix: w_mat[w*D + d, c] = weight[c, 0, w, d]
    w_mat = weight.reshape(C, W * D).T.astype(compute_dtype)        # (W*D, C)
    b_row = bias.astype(jnp.float32).reshape(1, 1, C)
    if C_pad != C:
        w_mat = jnp.pad(w_mat, ((0, 0), (0, C_pad - C)))
        b_row = jnp.pad(b_row, ((0, 0), (0, 0), (0, C_pad - C)))

    esz = jnp.dtype(compute_dtype).itemsize
    cost = pl.CostEstimate(
        flops=2 * B_pad * L_out * W * D * C_pad,
        transcendentals=0,
        bytes_accessed=(B_pad * S * D * esz + W * D * C_pad * esz
                        + C_pad * 4 + B_pad * C_pad * 4),
    )

    out3 = pl.pallas_call(
        _cnn_maxpool_kernel,
        out_shape=jax.ShapeDtypeStruct((B_pad, 1, C_pad), jnp.float32),
        grid_spec=pltpu.PrefetchScalarGridSpec(
            num_scalar_prefetch=0,
            grid=(B_pad // tb,),
            in_specs=[
                pl.BlockSpec((tb, S, D), lambda i: (i, 0, 0)),
                pl.BlockSpec((W * D, C_pad), lambda i: (0, 0)),
                pl.BlockSpec((1, 1, C_pad), lambda i: (0, 0, 0)),
            ],
            out_specs=pl.BlockSpec((tb, 1, C_pad), lambda i: (i, 0, 0)),
            scratch_shapes=[pltpu.VMEM((tb, L_pad, W * D), compute_dtype)],
        ),
        compiler_params=pltpu.CompilerParams(
            dimension_semantics=("parallel",),
            vmem_limit_bytes=_vmem_limit_bytes(),
        ),
        cost_estimate=cost,
    )(x_p, w_mat, b_row)

    # Drop batch / channel padding (padded rows/cols are bias-only / zeros).
    return out3[:B, 0, :C]


def cnn_maxpool_ref(x, weight, bias, window_size):
    """Pure-JAX reference mirroring the PyTorch forward."""
    B, S, D = x.shape
    C = weight.shape[0]
    L_out = S - window_size + 1
    idx = jnp.arange(L_out)[:, None] + jnp.arange(window_size)[None, :]
    x_col = x[:, idx, :].reshape(B, L_out, window_size * D)
    w_mat = weight.reshape(C, window_size * D).T
    scores = jnp.einsum("blk,kc->blc", x_col, w_mat,
                        precision=jax.lax.Precision.HIGHEST) + bias[None, None, :]
    return jnp.max(scores, axis=1)


if __name__ == "__main__":
    # Small, deterministic setup consistent with the module:
    #   word_dim=16, window_size=3, out_channels=32, batch=2, seq_len=8
    word_dim, window_size, out_channels = 16, 3, 32
    batch, seq_len = 2, 8

    key = jax.random.PRNGKey(0)
    kx, kw, kb = jax.random.split(key, 3)

    x = jax.random.normal(kx, (batch, seq_len, word_dim), dtype=jnp.float32)
    # Conv2d(1, out_channels, (window_size, word_dim)) parameter shapes:
    weight = jax.random.normal(
        kw, (out_channels, 1, window_size, word_dim), dtype=jnp.float32) * 0.1
    bias = jax.random.normal(kb, (out_channels,), dtype=jnp.float32) * 0.1

    ref = cnn_maxpool_ref(x, weight, bias, window_size)

    # Default fast path: bf16 operands, f32 accumulation.
    out_bf16 = jax.block_until_ready(cnn_maxpool(x, weight, bias, window_size))
    assert out_bf16.shape == (batch, out_channels)
    assert jnp.allclose(out_bf16, ref, atol=2e-2, rtol=2e-2)

    # f32 operands for tight numerical parity with the reference.
    out_f32 = jax.block_until_ready(
        cnn_maxpool(x, weight, bias, window_size, compute_dtype=jnp.float32))
    assert out_f32.shape == (batch, out_channels)
    assert jnp.allclose(out_f32, ref, atol=1e-4, rtol=1e-4)

    print("KERNEL_OK")
</pallas_src>

<mosaic_0001>
module attributes {stable_mosaic.version = 11 : i64} {
  func.func @_cnn_maxpool_kernel(%arg0: i32, %arg1: memref<1x8x16xbf16, #tpu.memory_space<vmem>>, %arg2: memref<48x128xbf16, #tpu.memory_space<vmem>>, %arg3: memref<1x1x128xf32, #tpu.memory_space<vmem>>, %arg4: memref<1x1x128xf32, #tpu.memory_space<vmem>>, %arg5: memref<1x8x48xbf16, #tpu.memory_space<vmem>>) attributes {dimension_semantics = [#tpu.dimension_semantics<parallel>], iteration_bounds = array<i64: 2>, scalar_prefetch = 0 : i64, scratch_operands = 1 : i64, tpu.core_type = #tpu.core_type<tc>, window_params = [{transform_indices = @transform_0, window_bounds = array<i64: 1, 8, 16>}, {pipeline_mode = #tpu.pipeline_mode<synchronous>, transform_indices = @transform_1, window_bounds = array<i64: 48, 128>}, {pipeline_mode = #tpu.pipeline_mode<synchronous>, transform_indices = @transform_2, window_bounds = array<i64: 1, 1, 128>}, {transform_indices = @transform_3, window_bounds = array<i64: 1, 1, 128>}]} {
    %c0 = arith.constant 0 : index
    %c0_0 = arith.constant 0 : index
    %c0_1 = arith.constant 0 : index
    %0 = vector.load %arg1[%c0, %c0_0, %c0_1] : memref<1x8x16xbf16, #tpu.memory_space<vmem>>, vector<1x6x16xbf16>
    %c0_2 = arith.constant 0 : index
    %c0_3 = arith.constant 0 : index
    %c0_4 = arith.constant 0 : index
    %1 = vector.load %arg5[%c0_2, %c0_3, %c0_4] : memref<1x8x48xbf16, #tpu.memory_space<vmem>>, vector<1x6x16xbf16>
    tpu.vector_store %arg5[%c0_2, %c0_3, %c0_4], %0 {strides = array<i32>} : memref<1x8x48xbf16, #tpu.memory_space<vmem>>, vector<1x6x16xbf16>,
    %c0_5 = arith.constant 0 : index
    %c1 = arith.constant 1 : index
    %c0_6 = arith.constant 0 : index
    %2 = vector.load %arg1[%c0_5, %c1, %c0_6] : memref<1x8x16xbf16, #tpu.memory_space<vmem>>, vector<1x6x16xbf16>
    %c0_7 = arith.constant 0 : index
    %c0_8 = arith.constant 0 : index
    %c16 = arith.constant 16 : index
    %3 = vector.load %arg5[%c0_7, %c0_8, %c16] : memref<1x8x48xbf16, #tpu.memory_space<vmem>>, vector<1x6x16xbf16>
    tpu.vector_store %arg5[%c0_7, %c0_8, %c16], %2 {strides = array<i32>} : memref<1x8x48xbf16, #tpu.memory_space<vmem>>, vector<1x6x16xbf16>,
    %c0_9 = arith.constant 0 : index
    %c2 = arith.constant 2 : index
    %c0_10 = arith.constant 0 : index
    %4 = vector.load %arg1[%c0_9, %c2, %c0_10] : memref<1x8x16xbf16, #tpu.memory_space<vmem>>, vector<1x6x16xbf16>
    %c0_11 = arith.constant 0 : index
    %c0_12 = arith.constant 0 : index
    %c32 = arith.constant 32 : index
    %5 = vector.load %arg5[%c0_11, %c0_12, %c32] : memref<1x8x48xbf16, #tpu.memory_space<vmem>>, vector<1x6x16xbf16>
    tpu.vector_store %arg5[%c0_11, %c0_12, %c32], %4 {strides = array<i32>} : memref<1x8x48xbf16, #tpu.memory_space<vmem>>, vector<1x6x16xbf16>,
    %cst = arith.constant 0.000000e+00 : bf16
    %6 = vector.broadcast %cst : bf16 to vector<1x2x48xbf16>
    %c0_13 = arith.constant 0 : index
    %c6 = arith.constant 6 : index
    %c0_14 = arith.constant 0 : index
    %7 = vector.load %arg5[%c0_13, %c6, %c0_14] : memref<1x8x48xbf16, #tpu.memory_space<vmem>>, vector<1x2x48xbf16>
    tpu.vector_store %arg5[%c0_13, %c6, %c0_14], %6 {strides = array<i32>} : memref<1x8x48xbf16, #tpu.memory_space<vmem>>, vector<1x2x48xbf16>,
    %c0_15 = arith.constant 0 : index
    %c0_16 = arith.constant 0 : index
    %c0_17 = arith.constant 0 : index
    %8 = vector.load %arg5[%c0_15, %c0_16, %c0_17] : memref<1x8x48xbf16, #tpu.memory_space<vmem>>, vector<1x8x48xbf16>
    %9 = vector.shape_cast %8 : vector<1x8x48xbf16> to vector<8x48xbf16>
    %c0_18 = arith.constant 0 : index
    %c0_19 = arith.constant 0 : index
    %10 = vector.load %arg2[%c0_18, %c0_19] : memref<48x128xbf16, #tpu.memory_space<vmem>>, vector<48x128xbf16>
    %cst_20 = arith.constant dense<0.000000e+00> : vector<8x128xf32>
    %11 = tpu.matmul %9, %10, %cst_20 {dimension_numbers = #tpu.dot_dimension_numbers<[1], [0], [0], [1], [0, 0, 1, 1], [], []>} : vector<8x48xbf16>, vector<48x128xbf16>, vector<8x128xf32> -> vector<8x128xf32>
    %12 = vector.shape_cast %11 : vector<8x128xf32> to vector<1x8x128xf32>
    %13 = tpu.iota {dimensions = array<i32: 1>} : vector<1x8x128xi32>
    %c6_i32 = arith.constant 6 : i32
    %14 = vector.broadcast %c6_i32 : i32 to vector<1x8x128xi32>
    %15 = arith.cmpi slt, %13, %14 : vector<1x8x128xi32>
    %cst_21 = arith.constant 0xFF800000 : f32
    %16 = vector.broadcast %cst_21 : f32 to vector<1x8x128xf32>
    %17 = arith.select %15, %12, %16 : vector<1x8x128xi1>, vector<1x8x128xf32>
    %cst_22 = arith.constant dense<0xFF800000> : vector<1x128xf32>
    %18 = vector.multi_reduction <maximumf>, %17, %cst_22 [1] : vector<1x8x128xf32> to vector<1x128xf32>
    %19 = vector.shape_cast %18 : vector<1x128xf32> to vector<1x1x128xf32>
    %c0_23 = arith.constant 0 : index
    %c0_24 = arith.constant 0 : index
    %c0_25 = arith.constant 0 : index
    %20 = vector.load %arg3[%c0_23, %c0_24, %c0_25] : memref<1x1x128xf32, #tpu.memory_space<vmem>>, vector<1x1x128xf32>
    %21 = arith.addf %19, %20 : vector<1x1x128xf32>
    %c0_26 = arith.constant 0 : index
    %c0_27 = arith.constant 0 : index
    %c0_28 = arith.constant 0 : index
    %22 = vector.load %arg4[%c0_26, %c0_27, %c0_28] : memref<1x1x128xf32, #tpu.memory_space<vmem>>, vector<1x1x128xf32>
    tpu.vector_store %arg4[%c0_26, %c0_27, %c0_28], %21 {strides = array<i32>} : memref<1x1x128xf32, #tpu.memory_space<vmem>>, vector<1x1x128xf32>,
    return
  }
  func.func @transform_0(%arg0: i32) -> (i32, i32, i32) {
    %c0_i32 = arith.constant 0 : i32
    %c0_i32_0 = arith.constant 0 : i32
    %c0_i32_1 = arith.constant 0 : i32
    return %arg0, %c0_i32, %c0_i32_0 : i32, i32, i32
  }
  func.func @transform_1(%arg0: i32) -> (i32, i32) {
    %c0_i32 = arith.constant 0 : i32
    %c0_i32_0 = arith.constant 0 : i32
    %c0_i32_1 = arith.constant 0 : i32
    return %c0_i32, %c0_i32_0 : i32, i32
  }
  func.func @transform_2(%arg0: i32) -> (i32, i32, i32) {
    %c0_i32 = arith.constant 0 : i32
    %c0_i32_0 = arith.constant 0 : i32
    %c0_i32_1 = arith.constant 0 : i32
    %c0_i32_2 = arith.constant 0 : i32
    return %c0_i32, %c0_i32_0, %c0_i32_1 : i32, i32, i32
  }
  func.func @transform_3(%arg0: i32) -> (i32, i32, i32) {
    %c0_i32 = arith.constant 0 : i32
    %c0_i32_0 = arith.constant 0 : i32
    %c0_i32_1 = arith.constant 0 : i32
    return %arg0, %c0_i32, %c0_i32_0 : i32, i32, i32
  }
}

</mosaic_0001>

<llo_original>
// kernel: tpu_custom_call.1
$region0: #{tpu_custom_call.1}
  #allocation0 [shape = 'u32[]', space=smem, size = 0x4, offset = 0x4, fixed_abs, tag = 'smem constant byte address 0x4 - core index']
  #allocation1 [shape = 'u32[144,128]{1,0:T(1,128)}', space=vmem, size = 0x12000, scoped, tag = 'internal scratch']
  #allocation2 [shape = 'bf16[1,8,48]{2,1,0:T(8,128)(2,1)}', space=vmem, size = 0x800, scoped, tag = 'scratch operand']
  %s0 = inlined_call_operand.hbm [shape: bf16[2,8,16], index: 0, kind: input, shape index: {}]
  %s1 = inlined_call_operand.hbm [shape: bf16[48,128], index: 1, kind: input, shape index: {}]
  %s2 = inlined_call_operand.vmem [shape: f32[1,1,128], index: 2, kind: input, shape index: {}]
  %s3 = inlined_call_operand.hbm [shape: f32[2,1,128], index: 3, kind: output, shape index: {}]
  %s4 = sld [smem:[#allocation0]]
  $region53: #{tpu_custom_call.1} parent=0
    _
  %s6 = ssub.s32 1, %s4
  %s7 = scalar_select 0, %s6, %s4
  $region1: #{tpu_custom_call.1} parent=0
    #allocation3 [shape = 'u8[4096]{0}', space=vmem, size = 0x1000, scoped, tag = 'input window, operand 0']
    #allocation4 [shape = 's32[2]{0}', space=sflag, size = 0x8, scoped, tag = 'scoped memory for tpu_custom_call.1']
    #allocation5 [shape = 's32[2]{0}', space=sflag, size = 0x8, scoped, tag = 'scoped memory for tpu_custom_call.1']
    #allocation6 [shape = 'u8[12288]{0}', space=vmem, size = 0x3000, scoped, tag = 'input window, operand 1, single buffered']
    #allocation7 [shape = 's32[1]{0}', space=sflag, size = 0x4, scoped, tag = 'scoped memory for tpu_custom_call.1']
    #allocation8 [shape = 'u8[1024]{0}', space=vmem, size = 0x400, scoped, tag = 'output window, operand 0']
    %8 = vsyncpa [#allocation4], 0
    %s9 = scalar_lea.sflag [#allocation4], 1
    %10 = vsyncpa %s9, 0
    %11 = vsyncpa [#allocation7], 0
    %12 = vsyncpa [#allocation5], 0
    %s13 = scalar_lea.sflag [#allocation5], 1
    %14 = vsyncpa %s13, 0
    loop: start=0, step=1, limit=4
    $region2: #{tpu_custom_call.1} parent=1 // loop_pre_header
      _
    $region3: #{tpu_custom_call.1} parent=1 // loop_header
      %s16 = sphi 0, %s20
      %p17 = scmp.ge.s32.totalorder %s16, 4
      %s26 = sphi 0, %s28
      %s29 = sphi 0, %s26
      %s30 = sphi 0, %s29
      %s46 = sphi 0, %s30
      %s50 = sphi 0, %s50
      %s52 = sphi 0, %s50
      %s53 = sphi 0, %s52
      %s67 = sphi 0, %s53
      %s71 = sphi 0, %s71
      %s73 = sphi 0, %s71
      %s74 = sphi 0, %s73
      %s88 = sphi 0, %s74
      %s94 = sphi 0, %s96
      %s97 = sphi 0, %s94
      %s98 = sphi 0, %s97
      %s114 = sphi 0, %s98
    $region4: #{tpu_custom_call.1} parent=1 // loop_header_branch
      %19 = sbr.rel (%p17) target = $region8
    $region5: #{tpu_custom_call.1} parent=1 // loop_body
      %s21 = ssub.s32 %s16, 1
      %s22 = ssub.s32 %s16, 2
      %s23 = sadd.s32 %s16, 1
      %s24 = ssub.s32 %s16, %s23
      %p25 = scmp.eq.s32.totalorder %s24, 0
      %s27 = sadd.s32 %s26, 1
      %s28 = scalar_select %p25, %s26, %s27
      %p31 = pneg %p25
      %p32 = scmp.eq.s32.totalorder %s16, 1
      %p33 = por %p31, %p32
      %p34 = scmp.ne.s32.totalorder %s26, %s29
      %p35 = scmp.eq.s32.totalorder %s16, 0
      %p36 = por %p34, %p35
      %p37 = scmp.ne.s32.totalorder %s26, %s29
      %p38 = scmp.eq.s32.totalorder %s21, 1
      %p39 = por %p37, %p38
      %p40 = scmp.ne.s32.totalorder %s29, %s30
      %p41 = scmp.eq.s32.totalorder %s21, 0
      %p42 = por %p40, %p41
      %p43 = scmp.ne.s32.totalorder %s29, %s30
      %p44 = scmp.eq.s32.totalorder %s22, 1
      %p45 = por %p43, %p44
      %p47 = scmp.ne.s32.totalorder %s30, %s46
      %p48 = scmp.eq.s32.totalorder %s22, 0
      %p49 = por %p47, %p48
      %s51 = sadd.s32 %s50, 1
      %p54 = scmp.eq.s32.totalorder %s16, 1
      %p55 = scmp.ne.s32.totalorder %s50, %s52
      %p56 = scmp.eq.s32.totalorder %s16, 0
      %p57 = por %p55, %p56
      %p58 = scmp.ne.s32.totalorder %s50, %s52
      %p59 = scmp.eq.s32.totalorder %s21, 1
      %p60 = por %p58, %p59
      %p61 = scmp.ne.s32.totalorder %s52, %s53
      %p62 = scmp.eq.s32.totalorder %s21, 0
      %p63 = por %p61, %p62
      %p64 = scmp.ne.s32.totalorder %s52, %s53
      %p65 = scmp.eq.s32.totalorder %s22, 1
      %p66 = por %p64, %p65
      %p68 = scmp.ne.s32.totalorder %s53, %s67
      %p69 = scmp.eq.s32.totalorder %s22, 0
      %p70 = por %p68, %p69
      %s72 = sadd.s32 %s71, 1
      %p75 = scmp.eq.s32.totalorder %s16, 1
      %p76 = scmp.ne.s32.totalorder %s71, %s73
      %p77 = scmp.eq.s32.totalorder %s16, 0
      %p78 = por %p76, %p77
      %p79 = scmp.ne.s32.totalorder %s71, %s73
      %p80 = scmp.eq.s32.totalorder %s21, 1
      %p81 = por %p79, %p80
      %p82 = scmp.ne.s32.totalorder %s73, %s74
      %p83 = scmp.eq.s32.totalorder %s21, 0
      %p84 = por %p82, %p83
      %p85 = scmp.ne.s32.totalorder %s73, %s74
      %p86 = scmp.eq.s32.totalorder %s22, 1
      %p87 = por %p85, %p86
      %p89 = scmp.ne.s32.totalorder %s74, %s88
      %p90 = scmp.eq.s32.totalorder %s22, 0
      %p91 = por %p89, %p90
      %s92 = ssub.s32 %s16, %s23
      %p93 = scmp.eq.s32.totalorder %s92, 0
      %s95 = sadd.s32 %s94, 1
      %s96 = scalar_select %p93, %s94, %s95
      %p99 = pneg %p93
      %p100 = scmp.eq.s32.totalorder %s16, 1
      %p101 = por %p99, %p100
      %p102 = scmp.ne.s32.totalorder %s94, %s97
      %p103 = scmp.eq.s32.totalorder %s16, 0
      %p104 = por %p102, %p103
      %p105 = scmp.ne.s32.totalorder %s94, %s97
      %p106 = scmp.eq.s32.totalorder %s21, 1
      %p107 = por %p105, %p106
      %p108 = scmp.ne.s32.totalorder %s97, %s98
      %p109 = scmp.eq.s32.totalorder %s21, 0
      %p110 = por %p108, %p109
      %p111 = scmp.ne.s32.totalorder %s97, %s98
      %p112 = scmp.eq.s32.totalorder %s22, 1
      %p113 = por %p111, %p112
      %p115 = scmp.ne.s32.totalorder %s98, %s114
      %p116 = scmp.eq.s32.totalorder %s22, 0
      %p117 = por %p115, %p116
      %p118 = scmp.le.s32.totalorder 1, %s16
      %p119 = scmp.lt.s32.totalorder %s16, 3
      %p120 = pnand %p118, %p119
      %p121 = pneg %p120
      // Predicated region
      $region9: #{tpu_custom_call.1} parent=5 // pred_check
        _
      $region10: #{tpu_custom_call.1} parent=5 // pred_check_branch
        %123 = sbr.rel (%p120) target = $region12
      $region11: #{tpu_custom_call.1} parent=5 // pred_region
        %s124 = ssub.s32 %s16, 1
        // Predicated region
        $region13: #{tpu_custom_call.1} parent=11 // pred_check
          %p125 = pneg %p63
        $region14: #{tpu_custom_call.1} parent=11 // pred_check_branch
          %127 = sbr.rel (%p125) target = $region16
        $region15: #{tpu_custom_call.1} parent=11 // pred_region
          %s129 = ssub.s32 384, 384
          %130 = vsyncadd [#allocation7], %s129
          %s131 = sshll.u32 [#allocation6], 4
          %s132 = int_to_ptr.vmem [resolvable:$true] %s131
          %137 = dma.hbm_to_vmem [thread:$0]  %s1, 384, %s132, [#allocation7], 64, 64, 4
        $region16: #{tpu_custom_call.1} parent=11 // pred_fallthru
          _
        // Predicated region
        $region17: #{tpu_custom_call.1} parent=11 // pred_check
          %p138 = pneg %p84
        $region18: #{tpu_custom_call.1} parent=11 // pred_check_branch
          %140 = sbr.rel (%p138) target = $region20
        $region19: #{tpu_custom_call.1} parent=11 // pred_region
          _
        $region20: #{tpu_custom_call.1} parent=11 // pred_fallthru
          _
      $region12: #{tpu_custom_call.1} parent=5 // pred_fallthru
        _
      %p141 = scmp.lt.s32.totalorder %s16, 2
      // Predicated region
      $region21: #{tpu_custom_call.1} parent=5 // pred_check
        %p142 = pneg %p141
      $region22: #{tpu_custom_call.1} parent=5 // pred_check_branch
        %144 = sbr.rel (%p142) target = $region24
      $region23: #{tpu_custom_call.1} parent=5 // pred_region
        // Predicated region
        $region25: #{tpu_custom_call.1} parent=23 // pred_check
          %p145 = pneg %p36
        $region26: #{tpu_custom_call.1} parent=23 // pred_check_branch
          %147 = sbr.rel (%p145) target = $region28
        $region27: #{tpu_custom_call.1} parent=23 // pred_region
          %s148 = sand.u32 %s26, 1
          %s149 = scalar_lea.sflag [#allocation4], %s148
          %s150 = sand.u32 %s26, 1
          %s151 = smul.addr %s150, 4
          %s152 = scalar_lea.vmem [#allocation3], %s151
          %s154 = ssub.s32 64, 64
          %155 = vsyncadd %s149, %s154
          %s156 = smul.addr %s16, 64
          %s157 = scalar_lea.hbm %s0, %s156
          %s159 = sshll.u32 %s152, 4
          %s160 = int_to_ptr.vmem [resolvable:$true] %s159
          %162 = dma.hbm_to_vmem [thread:$0]  %s157, 64, %s160, %s149
        $region28: #{tpu_custom_call.1} parent=23 // pred_fallthru
          _
      $region24: #{tpu_custom_call.1} parent=5 // pred_fallthru
        _
      %p163 = scmp.le.s32.totalorder 1, %s16
      %p164 = scmp.lt.s32.totalorder %s16, 3
      %p165 = pnand %p163, %p164
      %p166 = pneg %p165
      // Predicated region
      $region29: #{tpu_custom_call.1} parent=5 // pred_check
        _
      $region30: #{tpu_custom_call.1} parent=5 // pred_check_branch
        %168 = sbr.rel (%p165) target = $region32
      $region31: #{tpu_custom_call.1} parent=5 // pred_region
        %s169 = ssub.s32 %s16, 1
        %s170 = sand.u32 %s29, 1
        %s171 = scalar_lea.sflag [#allocation4], %s170
        %s172 = sand.u32 %s29, 1
        %s173 = smul.addr %s172, 4
        %s174 = scalar_lea.vmem [#allocation3], %s173
        // Predicated region
        $region33: #{tpu_custom_call.1} parent=31 // pred_check
          %p175 = pneg %p42
        $region34: #{tpu_custom_call.1} parent=31 // pred_check_branch
          %177 = sbr.rel (%p175) target = $region36
        $region35: #{tpu_custom_call.1} parent=31 // pred_region
          %178 = dma.done %s171, 64
        $region36: #{tpu_custom_call.1} parent=31 // pred_fallthru
          _
        // Predicated region
        $region37: #{tpu_custom_call.1} parent=31 // pred_check
          %p179 = pneg %p63
        $region38: #{tpu_custom_call.1} parent=31 // pred_check_branch
          %181 = sbr.rel (%p179) target = $region40
        $region39: #{tpu_custom_call.1} parent=31 // pred_region
          %182 = dma.done [#allocation7], 384
        $region40: #{tpu_custom_call.1} parent=31 // pred_fallthru
          _
        %s183 = sand.u32 %s29, 1
        %s184 = scalar_lea.sflag [#allocation4], %s183
        %s185 = sand.u32 %s29, 1
        %s186 = smul.addr %s185, 4
        %s187 = scalar_lea.vmem [#allocation3], %s186
        %p188 = pneg %p42
        %p189 = pneg %p39
        %p190 = pneg %p63
        %p191 = pneg %p60
        %p192 = pneg %p84
        %p193 = pneg %p81
        %p194 = pneg %p110
        %p195 = pneg %p107
        %s196 = sand.u32 %s97, 1
        %s197 = scalar_lea.sflag [#allocation5], %s196
        %s198 = sand.u32 %s97, 1
        %s199 = scalar_lea.vmem [#allocation8], %s198
        %v201 = vld [vmem:[%s174] sm:$0x7]
        %vm202 = vcmask 124928
        %203 = vst.msk [vmem:[#allocation2] sm:$0x7] %vm202, %v201
        %v204 = vld [vmem:[%s174] sm:$0xf]
        %v206 = vshrl.u32 %v204, 16
        %v208 = vrot.slane %v206, 4
        %v209 = vshll.u32 %v204, 16
        %v211 = vrot.slane %v209, 5
        %v212 = vor.u32 %v208, %v211
        %v213 = vrot.slane %v212, 4
        %214 = vrot.lane.b32.xlu0 %v213, 16
        %v215 = vpop.permute.xlu0 %214
        %vm217 = vcmask 256128
        %218 = vst.msk [vmem:[#allocation2] sm:$0x7] %vm217, %v215
        %v219 = vld [vmem:[%s174] sm:$0xe]
        %v221 = vrot.slane %v219, 5
        %v222 = vrot.slane %v221, 4
        %223 = vrot.lane.b32.xlu0 %v222, 32
        %v224 = vpop.permute.xlu0 %223
        %vm226 = vcmask 387328
        %227 = vst.msk [vmem:[#allocation2] sm:$0x7] %vm226, %v224
        %vm228 = vcmask 388099
        %229 = vst.msk [vmem:[#allocation2] sm:$0x8] %vm228, 0
        %v230 = vld [vmem:[#allocation2] sm:$0xf]
        %v231 = vld [vmem:[#allocation6] sm:$0xf]
        %v232 = vld [vmem:[#allocation6 + $0x4] sm:$0xf]
        %v233 = vld [vmem:[#allocation6 + $0x8] sm:$0xf]
        %v234 = vld [vmem:[#allocation6 + $0xc] sm:$0xf]
        %v235 = vld [vmem:[#allocation6 + $0x10] sm:$0xf]
        %v236 = vld [vmem:[#allocation6 + $0x14] sm:$0xf]
        %v243 = vunpack.c.l.b16 %v231
        %v244 = vunpack.c.l.b16 %v232
        %v245 = vunpack.c.l.b16 %v233
        %v246 = vunpack.c.l.b16 %v234
        %v247 = vunpack.c.l.b16 %v235
        %v248 = vunpack.c.l.b16 %v236
        %v249 = vpack.c.b16 %v244, %v243
        %v250 = vpack.c.b16 %v246, %v245
        %v251 = vpack.c.b16 %v248, %v247
        %vm255 = vcmask 392192
        %v257 = vsel %vm255, %v230, 0
        %259 = vmatprep.subr.bf16.mxu0 0
        %260 = vmatpush1.bf16.msra.mxu0 %v249
        %261 = vmatprep.subr.bf16.mxu0 0
        %262 = vmatpush1.bf16.msra.mxu0 %v250
        %263 = vmatprep.subr.bf16.mxu0 0
        %264 = vmatpush1.bf16.msra.mxu0 %v251
        %265 = vmatprep.subr.bf16.mxu0 0
        %266 = vmatpush1.bf16.msra.mxu0 0
        %267 = vmatprep.subr.bf16.mxu0 0
        %268 = vmatpush1.bf16.msra.mxu0 0
        %269 = vmatprep.subr.bf16.mxu0 0
        %270 = vmatpush1.bf16.msra.mxu0 0
        %271 = vmatprep.subr.bf16.mxu0 0
        %272 = vmatpush1.bf16.msra.mxu0 0
        %273 = vmatprep.subr.bf16.mxu0 0
        %274 = vmatpush1.bf16.msra.mxu0 0
        %275 = vmatprep.subr.bf16.mxu0 0
        %276 = vmatpush1.bf16.msra.mxu0 0
        %277 = vmatprep.subr.bf16.mxu0 0
        %278 = vmatpush1.bf16.msra.mxu0 0
        %279 = vmatprep.subr.bf16.mxu0 0
        %280 = vmatpush1.bf16.msra.mxu0 0
        %281 = vmatprep.subr.bf16.mxu0 0
        %282 = vmatpush1.bf16.msra.mxu0 0
        %283 = vmatprep.subr.bf16.mxu0 0
        %284 = vmatpush1.bf16.msra.mxu0 0
        %285 = vmatprep.subr.bf16.mxu0 0
        %286 = vmatpush1.bf16.msra.mxu0 0
        %287 = vmatprep.subr.bf16.mxu0 0
        %288 = vmatpush1.bf16.msra.mxu0 0
        %289 = vmatprep.subr.bf16.mxu0 0
        %290 = vmatpush1.bf16.msra.mxu0 0
        %291 = vmatprep.mubr.bf16.mxu0 0
        %292 = vmatmul.mubr.bf16.gmra.mrb[0].mxu0 %v257
        %v293 = vpop.f32.mrb[0].mxu0
        %v294 = vadd.f32 0.0, %v293
        %v295 = vpop.f32.mrb[0].mxu0
        %v296 = vpop.f32.mrb[0].mxu0
        %v297 = vpop.f32.mrb[0].mxu0
        %298 = vdwg.mxu0
        %v299 = vlaneseq
        %v300 = vshrl.u32 %v299, 7
        %vm301 = vcmp.lt.s32.totalorder %v300, 6
        %v302 = vsel %vm301, %v294, -inf
        %v303 = vrot.slane %v302, 4
        %v304 = vmax.f32 %v302, %v303
        %v305 = vrot.slane %v304, 2
        %v306 = vmax.f32 %v304, %v305
        %v307 = vrot.slane %v306, 1
        %v308 = vmax.f32 %v306, %v307
        %v309 = vld [vmem:[%s2] sm:$0x1]
        %v310 = vadd.f32 %v308, %v309
        %311 = vst [vmem:[%s199] sm:$0x1] %v310
        %s312 = sand.u32 %s97, 1
        %s313 = scalar_lea.sflag [#allocation5], %s312
        %s314 = sand.u32 %s97, 1
        %s315 = scalar_lea.vmem [#allocation8], %s314
        // Predicated region
        $region41: #{tpu_custom_call.1} parent=31 // pred_check
          %p316 = pneg %p107
        $region42: #{tpu_custom_call.1} parent=31 // pred_check_branch
          %318 = sbr.rel (%p316) target = $region44
        $region43: #{tpu_custom_call.1} parent=31 // pred_region
          %s320 = ssub.s32 16, 16
          %321 = vsyncadd %s313, %s320
          %s322 = smul.addr %s21, 16
          %s323 = scalar_lea.hbm %s3, %s322
          %s325 = sshll.u32 %s315, 4
          %s326 = int_to_ptr.vmem [resolvable:$true] %s325
          %328 = dma.vmem_to_hbm [thread:$0]  %s326, 16, %s323, %s313
        $region44: #{tpu_custom_call.1} parent=31 // pred_fallthru
          _
      $region32: #{tpu_custom_call.1} parent=5 // pred_fallthru
        _
      %p329 = scmp.le.s32.totalorder 2, %s16
      // Predicated region
      $region45: #{tpu_custom_call.1} parent=5 // pred_check
        %p330 = pneg %p329
      $region46: #{tpu_custom_call.1} parent=5 // pred_check_branch
        %332 = sbr.rel (%p330) target = $region48
      $region47: #{tpu_custom_call.1} parent=5 // pred_region
        %s333 = ssub.s32 %s16, 2
        // Predicated region
        $region49: #{tpu_custom_call.1} parent=47 // pred_check
          %p334 = pneg %p113
        $region50: #{tpu_custom_call.1} parent=47 // pred_check_branch
          %336 = sbr.rel (%p334) target = $region52
        $region51: #{tpu_custom_call.1} parent=47 // pred_region
          %s337 = sand.u32 %s98, 1
          %s338 = scalar_lea.sflag [#allocation5], %s337
          %s339 = sand.u32 %s98, 1
          %s340 = scalar_lea.vmem [#allocation8], %s339
          %341 = dma.done %s338, 16
        $region52: #{tpu_custom_call.1} parent=47 // pred_fallthru
          _
      $region48: #{tpu_custom_call.1} parent=5 // pred_fallthru
        _
    $region6: #{tpu_custom_call.1} parent=1 // loop_footer
      %s20 = sadd.s32 1, %s16
    $region7: #{tpu_custom_call.1} parent=1 // loop_footer_branch
      %15 = sbr.rel target = $region3
    $region8: #{tpu_custom_call.1} parent=1 // loop_exit
      _
    %342 = vsyncpa [#allocation4], 1
    %s343 = scalar_lea.sflag [#allocation4], 1
    %344 = vsyncpa %s343, 1
    %345 = vsyncpa [#allocation7], 1
    %346 = vsyncpa [#allocation5], 1
    %s347 = scalar_lea.sflag [#allocation5], 1
    %348 = vsyncpa %s347, 1

</llo_original>
